<compile_context>
chip_gen: v5e
topology: v5e:2x2
jax: 0.10.0
libtpu: 0.0.40
codegen_flags: <defaults>
</compile_context>

<pallas_src>
import functools

import numpy as np

import jax
import jax.numpy as jnp
from jax import lax
from jax.experimental import pallas as pl
from jax.experimental.pallas import tpu as pltpu


def _per_channel_allreduce(row, cout, wo):
    """row: (1, Wo*Cout).  Returns (1, Wo*Cout) where every lane holds the sum of its
    channel (lane % Cout) over all Wo groups.  Pure XLU lane rotations, no reshapes."""
    if wo == 1:
        return row
    if (wo & (wo - 1)) == 0:                      # power of two: log2(Wo) rotate-adds
        total = row
        shift = cout
        while shift < wo * cout:
            total = total + pltpu.roll(total, shift=shift, axis=1)
            shift *= 2
        return total
    total = row                                    # general Wo: Wo-1 rotate-adds
    r = row
    for _ in range(wo - 1):
        r = pltpu.roll(r, shift=cout, axis=1)
        total = total + r
    return total


def _convlayer_kernel(*refs, k, stride, pad, Ho, Wo, Cout,
                      apply_bn, has_affine, eps, compute_dtype):
    """Whole (small) batch in one grid step.

    refs (inputs..., out):
      x_ref:  (N, H, W*Cin)           lane-dense activations
      w_ref:  (k*W*Cin, Wo*Cout)      banded conv weight (W-reflection folded in)
      then, if not apply_bn:      shift_ref (1, Wo*Cout)  tiled conv bias
      else if has_affine:         gamma_ref, beta_ref (1, Wo*Cout)
      o_ref:  (N*Ho, Wo*Cout)         lane-dense output block
    """
    if apply_bn:
        if has_affine:
            x_ref, w_ref, gamma_ref, beta_ref, o_ref = refs
        else:
            x_ref, w_ref, o_ref = refs
    else:
        x_ref, w_ref, shift_ref, o_ref = refs

    x = x_ref[...].astype(compute_dtype)           # cast once, before any layout work
    N, H, WC = x.shape

    # Reflection pad along H only (the W-direction reflection lives in w_ref).
    if pad > 0:
        top = [x[:, i:i + 1] for i in range(pad, 0, -1)]
        bot = [x[:, i:i + 1] for i in range(H - 2, H - 2 - pad, -1)]
        x = jnp.concatenate(top + [x] + bot, axis=1)            # (N, Hp, W*Cin)

    # Per-kh row slabs (lane-dense), lane-concat into the matmul LHS.
    slabs = [x[:, kh: kh + stride * (Ho - 1) + 1: stride, :] for kh in range(k)]
    lhs = jnp.concatenate(slabs, axis=-1)                       # (N, Ho, k*W*Cin)
    lhs = lhs.reshape(N * Ho, k * WC)                           # leading-dim merge only

    # Single MXU matmul; the accumulator is natively the lane-dense output layout.
    acc = jnp.dot(lhs, w_ref[...], preferred_element_type=jnp.float32)  # (N*Ho, Wo*Cout)

    if apply_bn:
        # Training-mode BatchNorm2d with batch statistics, fully in-kernel.  Valid
        # because the whole batch lives in this single grid step; the conv bias
        # cancels under mean subtraction so it is never added.
        m_count = N * Ho * Wo
        col_sum = jnp.sum(acc, axis=0, keepdims=True)           # (1, Wo*Cout)
        mean_t = _per_channel_allreduce(col_sum, Cout, Wo) * (1.0 / m_count)
        d = acc - mean_t
        col_ss = jnp.sum(d * d, axis=0, keepdims=True)
        var_t = _per_channel_allreduce(col_ss, Cout, Wo) * (1.0 / m_count)
        out = d * lax.rsqrt(var_t + eps)
        if has_affine:
            out = out * gamma_ref[...] + beta_ref[...]
    else:
        out = acc + shift_ref[...]                              # bias; no all-ones scale

    o_ref[...] = jnp.maximum(out, 0.0).astype(o_ref.dtype)      # ReLU, unmasked vst


def conv_layer_forward(x_nchw, weight_oihw, bias, *, stride=1, is_last=False,
                       bn_gamma=None, bn_beta=None, eps=1e-5,
                       compute_dtype=jnp.bfloat16):
    """Matches ConvLayer.forward: reflect-pad -> conv -> [BN] -> ReLU (NCHW I/O)."""
    N, Cin, H, W = x_nchw.shape
    Cout, Cin_w, k, k2 = weight_oihw.shape
    assert Cin_w == Cin and k == k2 and stride >= 1
    pad = k // 2
    assert pad <= H - 1 and pad <= W - 1, "reflection pad requires pad <= dim - 1"
    Ho = (H + 2 * pad - k) // stride + 1
    Wo = (W + 2 * pad - k) // stride + 1
    L = Wo * Cout

    # Lane-dense activations: NCHW -> NHWC -> (N, H, W*Cin).
    x_ld = jnp.transpose(x_nchw, (0, 2, 3, 1)).reshape(N, H, W * Cin)

    # Banded ("Toeplitz") weight with the W-direction reflection folded in:
    #   w_big[kh*W*Cin + c*Cin + ci, wo*Cout + co] =
    #       sum_kw 1[c == reflect(wo*stride + kw - pad)] * weight[co, ci, kh, kw]
    # TODO(synk): this is sized for small W*Cout; production shapes use the tiled
    #   im2col path described at the top of the file instead.
    def _reflect(j):
        if j < 0:
            return -j
        if j >= W:
            return 2 * (W - 1) - j
        return j

    sel = np.zeros((k, Wo, W), np.float32)
    for kw in range(k):
        for wo in range(Wo):
            sel[kw, wo, _reflect(wo * stride + kw - pad)] = 1.0
    w_big = jnp.einsum("qwc,oihq->hciwo", jnp.asarray(sel),
                       weight_oihw.astype(jnp.float32))
    w_big = w_big.reshape(k * W * Cin, L).astype(compute_dtype)

    inputs = [x_ld, w_big]
    in_specs = [
        pl.BlockSpec((N, H, W * Cin), lambda i: (0, 0, 0)),
        pl.BlockSpec((k * W * Cin, L), lambda i: (0, 0)),
    ]
    has_affine = False
    if not is_last:
        shift = jnp.tile(bias.astype(jnp.float32), Wo).reshape(1, L)
        inputs.append(shift)
        in_specs.append(pl.BlockSpec((1, L), lambda i: (0, 0)))
    elif bn_gamma is not None or bn_beta is not None:
        has_affine = True
        g = (jnp.ones((Cout,), jnp.float32) if bn_gamma is None
             else bn_gamma.astype(jnp.float32))
        b = (jnp.zeros((Cout,), jnp.float32) if bn_beta is None
             else bn_beta.astype(jnp.float32))
        inputs += [jnp.tile(g, Wo).reshape(1, L), jnp.tile(b, Wo).reshape(1, L)]
        in_specs += [pl.BlockSpec((1, L), lambda i: (0, 0)),
                     pl.BlockSpec((1, L), lambda i: (0, 0))]

    kern = functools.partial(_convlayer_kernel, k=k, stride=stride, pad=pad,
                             Ho=Ho, Wo=Wo, Cout=Cout, apply_bn=is_last,
                             has_affine=has_affine, eps=eps,
                             compute_dtype=compute_dtype)

    out2d = pl.pallas_call(
        kern,
        out_shape=jax.ShapeDtypeStruct((N * Ho, L), x_nchw.dtype),
        grid_spec=pltpu.PrefetchScalarGridSpec(
            num_scalar_prefetch=0,
            grid=(1,),  # whole batch in one step: BN batch stats stay exact
            in_specs=in_specs,
            out_specs=pl.BlockSpec((N * Ho, L), lambda i: (0, 0)),
        ),
        compiler_params=pltpu.CompilerParams(
            dimension_semantics=("arbitrary",)),
    )(*inputs)

    return out2d.reshape(N, Ho, Wo, Cout).transpose(0, 3, 1, 2)  # back to NCHW


def _reference_forward(x, weight, bias, *, stride, is_last, eps=1e-5):
    """Pure-JAX reference: reflect pad -> VALID conv -> bias -> [BN] -> ReLU."""
    Cout = weight.shape[0]
    pad = weight.shape[-1] // 2
    x_nhwc = jnp.transpose(x, (0, 2, 3, 1))
    xp = jnp.pad(x_nhwc, ((0, 0), (pad, pad), (pad, pad), (0, 0)), mode="reflect")
    y = lax.conv_general_dilated(
        xp, jnp.transpose(weight, (2, 3, 1, 0)),
        window_strides=(stride, stride), padding="VALID",
        dimension_numbers=("NHWC", "HWIO", "NHWC"))
    y = y + bias.reshape(1, 1, 1, Cout)
    if is_last:
        mean = jnp.mean(y, axis=(0, 1, 2), keepdims=True)
        var = jnp.var(y, axis=(0, 1, 2), keepdims=True)
        y = (y - mean) * lax.rsqrt(var + eps)
    y = jnp.maximum(y, 0.0)
    return jnp.transpose(y, (0, 3, 1, 2))


if __name__ == "__main__":
    key = jax.random.PRNGKey(0)
    k1, k2, k3 = jax.random.split(key, 3)

    # Shapes consistent with ConvLayer(4, 8, kernel_size=3, stride=1).
    N, Cin, H, W = 2, 4, 16, 16
    Cout, ksize, stride = 8, 3, 1

    x = jax.random.normal(k1, (N, Cin, H, W), jnp.float32)
    weight = jax.random.normal(k2, (Cout, Cin, ksize, ksize), jnp.float32) * 0.1
    bias = jax.random.normal(k3, (Cout,), jnp.float32) * 0.1

    # 1) f32 MXU operands, is_last=False (conv -> bias -> ReLU).
    out = jax.block_until_ready(conv_layer_forward(
        x, weight, bias, stride=stride, is_last=False, compute_dtype=jnp.float32))
    ref = _reference_forward(x, weight, bias, stride=stride, is_last=False)
    assert out.shape == (N, Cout, H, W), out.shape
    assert jnp.allclose(out, ref, atol=2e-4, rtol=2e-4), \
        float(jnp.max(jnp.abs(out - ref)))

    # 2) f32, is_last=True (conv -> BatchNorm(batch stats) -> ReLU).
    out_bn = jax.block_until_ready(conv_layer_forward(
        x, weight, bias, stride=stride, is_last=True, compute_dtype=jnp.float32))
    ref_bn = _reference_forward(x, weight, bias, stride=stride, is_last=True)
    assert jnp.allclose(out_bn, ref_bn, atol=1e-3, rtol=1e-3), \
        float(jnp.max(jnp.abs(out_bn - ref_bn)))

    # 3) default bf16 MXU operands (f32 accumulation / epilogue) vs exact f32 ref.
    out_bf16 = jax.block_until_ready(conv_layer_forward(
        x, weight, bias, stride=stride, is_last=False))
    assert jnp.allclose(out_bf16, ref, atol=3e-2, rtol=3e-2), \
        float(jnp.max(jnp.abs(out_bf16 - ref)))

    print("KERNEL_OK")
</pallas_src>

<mosaic_0001>
module attributes {stable_mosaic.version = 11 : i64} {
  func.func @_convlayer_kernel(%arg0: i32, %arg1: memref<2x16x64xf32, #tpu.memory_space<vmem>>, %arg2: memref<192x128xf32, #tpu.memory_space<vmem>>, %arg3: memref<1x128xf32, #tpu.memory_space<vmem>>, %arg4: memref<32x128xf32, #tpu.memory_space<vmem>>) attributes {dimension_semantics = [#tpu.dimension_semantics<arbitrary>], iteration_bounds = array<i64: 1>, scalar_prefetch = 0 : i64, scratch_operands = 0 : i64, tpu.core_type = #tpu.core_type<tc>, window_params = [{pipeline_mode = #tpu.pipeline_mode<synchronous>, transform_indices = @transform_0, window_bounds = array<i64: 2, 16, 64>}, {pipeline_mode = #tpu.pipeline_mode<synchronous>, transform_indices = @transform_1, window_bounds = array<i64: 192, 128>}, {pipeline_mode = #tpu.pipeline_mode<synchronous>, transform_indices = @transform_2, window_bounds = array<i64: 1, 128>}, {pipeline_mode = #tpu.pipeline_mode<synchronous>, transform_indices = @transform_3, window_bounds = array<i64: 32, 128>}]} {
    %c0 = arith.constant 0 : index
    %c0_0 = arith.constant 0 : index
    %c0_1 = arith.constant 0 : index
    %0 = vector.load %arg1[%c0, %c0_0, %c0_1] : memref<2x16x64xf32, #tpu.memory_space<vmem>>, vector<2x16x64xf32>
    %1 = vector.extract_strided_slice %0 {offsets = [0, 1, 0], sizes = [2, 1, 64], strides = [1, 1, 1]} : vector<2x16x64xf32> to vector<2x1x64xf32>
    %2 = vector.extract_strided_slice %0 {offsets = [0, 14, 0], sizes = [2, 1, 64], strides = [1, 1, 1]} : vector<2x16x64xf32> to vector<2x1x64xf32>
    %3 = tpu.concatenate %1, %0, %2 in 1 : vector<2x1x64xf32>, vector<2x16x64xf32>, vector<2x1x64xf32> -> vector<2x18x64xf32>
    %4 = vector.extract_strided_slice %3 {offsets = [0, 0, 0], sizes = [2, 16, 64], strides = [1, 1, 1]} : vector<2x18x64xf32> to vector<2x16x64xf32>
    %5 = vector.extract_strided_slice %3 {offsets = [0, 1, 0], sizes = [2, 16, 64], strides = [1, 1, 1]} : vector<2x18x64xf32> to vector<2x16x64xf32>
    %6 = vector.extract_strided_slice %3 {offsets = [0, 2, 0], sizes = [2, 16, 64], strides = [1, 1, 1]} : vector<2x18x64xf32> to vector<2x16x64xf32>
    %7 = tpu.concatenate %4, %5, %6 in 2 : vector<2x16x64xf32>, vector<2x16x64xf32>, vector<2x16x64xf32> -> vector<2x16x192xf32>
    %8 = vector.shape_cast %7 : vector<2x16x192xf32> to vector<32x192xf32>
    %c0_2 = arith.constant 0 : index
    %c0_3 = arith.constant 0 : index
    %9 = vector.load %arg2[%c0_2, %c0_3] : memref<192x128xf32, #tpu.memory_space<vmem>>, vector<192x128xf32>
    %cst = arith.constant dense<0.000000e+00> : vector<32x128xf32>
    %10 = tpu.matmul %8, %9, %cst {dimension_numbers = #tpu.dot_dimension_numbers<[1], [0], [0], [1], [0, 0, 1, 1], [], []>} : vector<32x192xf32>, vector<192x128xf32>, vector<32x128xf32> -> vector<32x128xf32>
    %c0_4 = arith.constant 0 : index
    %c0_5 = arith.constant 0 : index
    %11 = vector.load %arg3[%c0_4, %c0_5] : memref<1x128xf32, #tpu.memory_space<vmem>>, vector<1x128xf32>
    %12 = vector.broadcast %11 : vector<1x128xf32> to vector<32x128xf32>
    %13 = arith.addf %10, %12 : vector<32x128xf32>
    %cst_6 = arith.constant 0.000000e+00 : f32
    %14 = vector.broadcast %cst_6 : f32 to vector<32x128xf32>
    %15 = arith.maximumf %13, %14 : vector<32x128xf32>
    %c0_7 = arith.constant 0 : index
    %c0_8 = arith.constant 0 : index
    %16 = vector.load %arg4[%c0_7, %c0_8] : memref<32x128xf32, #tpu.memory_space<vmem>>, vector<32x128xf32>
    tpu.vector_store %arg4[%c0_7, %c0_8], %15 {strides = array<i32>} : memref<32x128xf32, #tpu.memory_space<vmem>>, vector<32x128xf32>,
    return
  }
  func.func @transform_0(%arg0: i32) -> (i32, i32, i32) {
    %c0_i32 = arith.constant 0 : i32
    %c0_i32_0 = arith.constant 0 : i32
    %c0_i32_1 = arith.constant 0 : i32
    %c0_i32_2 = arith.constant 0 : i32
    return %c0_i32, %c0_i32_0, %c0_i32_1 : i32, i32, i32
  }
  func.func @transform_1(%arg0: i32) -> (i32, i32) {
    %c0_i32 = arith.constant 0 : i32
    %c0_i32_0 = arith.constant 0 : i32
    %c0_i32_1 = arith.constant 0 : i32
    return %c0_i32, %c0_i32_0 : i32, i32
  }
  func.func @transform_2(%arg0: i32) -> (i32, i32) {
    %c0_i32 = arith.constant 0 : i32
    %c0_i32_0 = arith.constant 0 : i32
    %c0_i32_1 = arith.constant 0 : i32
    return %c0_i32, %c0_i32_0 : i32, i32
  }
  func.func @transform_3(%arg0: i32) -> (i32, i32) {
    %c0_i32 = arith.constant 0 : i32
    %c0_i32_0 = arith.constant 0 : i32
    %c0_i32_1 = arith.constant 0 : i32
    return %c0_i32, %c0_i32_0 : i32, i32
  }
}

</mosaic_0001>

<llo_original>
// kernel: tpu_custom_call.1
$region0: #{tpu_custom_call.1}
  #allocation0 [shape = 'u32[]', space=smem, size = 0x4, offset = 0x4, fixed_abs, tag = 'smem constant byte address 0x4 - core index']
  #allocation1 [shape = 'u32[72,128]{1,0:T(1,128)}', space=vmem, size = 0x9000, scoped, tag = 'internal scratch']
  %s0 = inlined_call_operand.hbm [shape: f32[2,16,64], index: 0, kind: input, shape index: {}]
  %s1 = inlined_call_operand.hbm [shape: f32[192,128], index: 1, kind: input, shape index: {}]
  %s2 = inlined_call_operand.vmem [shape: f32[1,128], index: 2, kind: input, shape index: {}]
  %s3 = inlined_call_operand.hbm [shape: f32[32,128], index: 3, kind: output, shape index: {}]
  %s4 = sld [smem:[#allocation0]]
  $region30: #{tpu_custom_call.1} parent=0
    _
  %s6 = ssub.s32 1, %s4
  %s7 = scalar_select 0, %s6, %s4
  $region1: #{tpu_custom_call.1} parent=0
    #allocation2 [shape = 'u8[16384]{0}', space=vmem, size = 0x4000, scoped, tag = 'input window, operand 0, single buffered']
    #allocation3 [shape = 's32[1]{0}', space=sflag, size = 0x4, scoped, tag = 'scoped memory for tpu_custom_call.1']
    #allocation4 [shape = 's32[1]{0}', space=sflag, size = 0x4, scoped, tag = 'scoped memory for tpu_custom_call.1']
    #allocation5 [shape = 'u8[98304]{0}', space=vmem, size = 0x18000, scoped, tag = 'input window, operand 1, single buffered']
    #allocation6 [shape = 's32[1]{0}', space=sflag, size = 0x4, scoped, tag = 'scoped memory for tpu_custom_call.1']
    #allocation7 [shape = 'u8[16384]{0}', space=vmem, size = 0x4000, scoped, tag = 'output window, operand 0, single buffered']
    %8 = vsyncpa [#allocation3], 0
    %9 = vsyncpa [#allocation6], 0
    %10 = vsyncpa [#allocation4], 0
    // Predicated region
    $region2: #{tpu_custom_call.1} parent=1 // pred_check
      _
    $region3: #{tpu_custom_call.1} parent=1 // pred_check_branch
      %12 = sbr.rel (0) target = $region5
    $region4: #{tpu_custom_call.1} parent=1 // pred_region
      %14 = vsyncadd [#allocation3], 0
      %s15 = sshll.u32 %s0, 4
      %s16 = int_to_ptr.hbm [resolvable:$true] %s15
      %s17 = sshll.u32 [#allocation2], 4
      %s18 = int_to_ptr.vmem [resolvable:$true] %s17
      %23 = dma.hbm_to_vmem [thread:$0]  %s16, 512, %s18, [#allocation3], 128, 128, 8
    $region5: #{tpu_custom_call.1} parent=1 // pred_fallthru
      _
    // Predicated region
    $region6: #{tpu_custom_call.1} parent=1 // pred_check
      _
    $region7: #{tpu_custom_call.1} parent=1 // pred_check_branch
      %25 = sbr.rel (0) target = $region9
    $region8: #{tpu_custom_call.1} parent=1 // pred_region
      %27 = vsyncadd [#allocation6], 0
      %s28 = sshll.u32 %s1, 4
      %s29 = int_to_ptr.hbm [resolvable:$true] %s28
      %s30 = sshll.u32 [#allocation5], 4
      %s31 = int_to_ptr.vmem [resolvable:$true] %s30
      %36 = dma.hbm_to_vmem [thread:$0]  %s29, 3072, %s31, [#allocation6], 128, 128, 8
    $region9: #{tpu_custom_call.1} parent=1 // pred_fallthru
      _
    // Predicated region
    $region10: #{tpu_custom_call.1} parent=1 // pred_check
      _
    $region11: #{tpu_custom_call.1} parent=1 // pred_check_branch
      %38 = sbr.rel (0) target = $region13
    $region12: #{tpu_custom_call.1} parent=1 // pred_region
      _
    $region13: #{tpu_custom_call.1} parent=1 // pred_fallthru
      _
    // Predicated region
    $region14: #{tpu_custom_call.1} parent=1 // pred_check
      _
    $region15: #{tpu_custom_call.1} parent=1 // pred_check_branch
      %40 = sbr.rel (0) target = $region17
    $region16: #{tpu_custom_call.1} parent=1 // pred_region
      %42 = dma.done [#allocation3], 512
    $region17: #{tpu_custom_call.1} parent=1 // pred_fallthru
      _
    // Predicated region
    $region18: #{tpu_custom_call.1} parent=1 // pred_check
      _
    $region19: #{tpu_custom_call.1} parent=1 // pred_check_branch
      %44 = sbr.rel (0) target = $region21
    $region20: #{tpu_custom_call.1} parent=1 // pred_region
      %46 = dma.done [#allocation6], 3072
    $region21: #{tpu_custom_call.1} parent=1 // pred_fallthru
      _
    %v47 = vld [vmem:[#allocation2] sm:$0xff]
    %v48 = vld [vmem:[#allocation2 + $0x8] sm:$0xff]
    %v49 = vld [vmem:[#allocation2 + $0x10] sm:$0xff]
    %v50 = vld [vmem:[#allocation2 + $0x18] sm:$0xff]
    %v53 = vrot.slane %v47, 1
    %v54 = vrot.slane %v49, 1
    %vm59 = vcmask 1040384
    %v60 = vrot.slane %v47, 7
    %v61 = vrot.slane %v48, 7
    %v62 = vsel %vm59, %v60, %v61
    %v63 = vrot.slane %v49, 7
    %v64 = vrot.slane %v50, 7
    %v65 = vsel %vm59, %v63, %v64
    %v72 = vrot.slane %v48, 5
    %v73 = vrot.slane %v50, 5
    %v76 = vsel %vm59, %v53, %v60
    %v77 = vsel %vm59, %v54, %v63
    %v78 = vsel %vm59, %v61, %v72
    %v79 = vsel %vm59, %v64, %v73
    %vm84 = vcmask 1046528
    %v85 = vrot.slane %v76, 1
    %v86 = vrot.slane %v62, 1
    %v87 = vsel %vm84, %v85, %v86
    %v88 = vrot.slane %v78, 1
    %v89 = vsel %vm84, %v86, %v88
    %v90 = vrot.slane %v77, 1
    %v91 = vrot.slane %v65, 1
    %v92 = vsel %vm84, %v90, %v91
    %v93 = vrot.slane %v79, 1
    %v94 = vsel %vm84, %v91, %v93
    %95 = vrot.lane.b32.xlu0 %v87, 64
    %v96 = vpop.permute.xlu0 %95
    %97 = vrot.lane.b32.xlu0 %v89, 64
    %v98 = vpop.permute.xlu0 %97
    %99 = vrot.lane.b32.xlu0 %v92, 64
    %v100 = vpop.permute.xlu0 %99
    %101 = vrot.lane.b32.xlu0 %v94, 64
    %v102 = vpop.permute.xlu0 %101
    %vm107 = vcmask 1045504
    %v108 = vrot.slane %v76, 2
    %v109 = vrot.slane %v62, 2
    %v110 = vsel %vm107, %v108, %v109
    %v111 = vrot.slane %v78, 2
    %v112 = vsel %vm107, %v109, %v111
    %v113 = vrot.slane %v77, 2
    %v114 = vrot.slane %v65, 2
    %v115 = vsel %vm107, %v113, %v114
    %v116 = vrot.slane %v79, 2
    %v117 = vsel %vm107, %v114, %v116
    %vm118 = vcmask 523264
    %v119 = vsel %vm118, %v76, %v96
    %v120 = vsel %vm118, %v62, %v98
    %v121 = vsel %vm118, %v77, %v100
    %v122 = vsel %vm118, %v65, %v102
    %v123 = vld [vmem:[#allocation5] sm:$0xff]
    %v124 = vld [vmem:[#allocation5 + $0x8] sm:$0xff]
    %v125 = vld [vmem:[#allocation5 + $0x10] sm:$0xff]
    %v126 = vld [vmem:[#allocation5 + $0x18] sm:$0xff]
    %v127 = vld [vmem:[#allocation5 + $0x20] sm:$0xff]
    %v128 = vld [vmem:[#allocation5 + $0x28] sm:$0xff]
    %v129 = vld [vmem:[#allocation5 + $0x30] sm:$0xff]
    %v130 = vld [vmem:[#allocation5 + $0x38] sm:$0xff]
    %v131 = vld [vmem:[#allocation5 + $0x40] sm:$0xff]
    %v132 = vld [vmem:[#allocation5 + $0x48] sm:$0xff]
    %v133 = vld [vmem:[#allocation5 + $0x50] sm:$0xff]
    %v134 = vld [vmem:[#allocation5 + $0x58] sm:$0xff]
    %v135 = vld [vmem:[#allocation5 + $0x60] sm:$0xff]
    %v136 = vld [vmem:[#allocation5 + $0x68] sm:$0xff]
    %v137 = vld [vmem:[#allocation5 + $0x70] sm:$0xff]
    %v138 = vld [vmem:[#allocation5 + $0x78] sm:$0xff]
    %v139 = vld [vmem:[#allocation5 + $0x80] sm:$0xff]
    %v140 = vld [vmem:[#allocation5 + $0x88] sm:$0xff]
    %v141 = vld [vmem:[#allocation5 + $0x90] sm:$0xff]
    %v142 = vld [vmem:[#allocation5 + $0x98] sm:$0xff]
    %v143 = vld [vmem:[#allocation5 + $0xa0] sm:$0xff]
    %v144 = vld [vmem:[#allocation5 + $0xa8] sm:$0xff]
    %v145 = vld [vmem:[#allocation5 + $0xb0] sm:$0xff]
    %v146 = vld [vmem:[#allocation5 + $0xb8] sm:$0xff]
    %v147 = vld [vmem:[%s2] sm:$0x1]
    %v149 = vperm.slane %v147, 0
    %v151 = vsel %vm118, %v110, 0
    %v153 = vsel %vm118, %v112, 0
    %v155 = vsel %vm118, %v115, 0
    %v157 = vsel %vm118, %v117, 0
    %159 = vmatpush.msra.mxu0 %v138
    %160 = vmatpush.msra.mxu0 %v137
    %161 = vmatpush.msra.mxu0 %v136
    %162 = vmatpush.msra.mxu0 %v135
    %163 = vmatpush.msra.mxu0 %v134
    %164 = vmatpush.msra.mxu0 %v133
    %165 = vmatpush.msra.mxu0 %v132
    %166 = vmatpush.msra.mxu0 %v131
    %167 = vmatpush.msra.mxu0 %v130
    %168 = vmatpush.msra.mxu0 %v129
    %169 = vmatpush.msra.mxu0 %v128
    %170 = vmatpush.msra.mxu0 %v127
    %171 = vmatpush.msra.mxu0 %v126
    %172 = vmatpush.msra.mxu0 %v125
    %173 = vmatpush.msra.mxu0 %v124
    %174 = vmatpush.msra.mxu0 %v123
    %175 = vmatmul.f32.gmra.mxu0 %v119
    %v176 = vpop.f32.mrf.mxu0
    %v177 = vadd.f32 %v149, %v176
    %178 = vmatmul.f32.gmra.mxu0 %v120
    %v179 = vpop.f32.mrf.mxu0
    %v180 = vadd.f32 %v149, %v179
    %181 = vmatmul.f32.gmra.mxu0 %v121
    %v182 = vpop.f32.mrf.mxu0
    %v183 = vadd.f32 %v149, %v182
    %184 = vmatmul.f32.gmra.mxu0 %v122
    %v185 = vpop.f32.mrf.mxu0
    %v186 = vadd.f32 %v149, %v185
    %187 = vdwg.mxu0
    %188 = vmatpush.msra.mxu0 0.0
    %189 = vmatpush.msra.mxu0 0.0
    %190 = vmatpush.msra.mxu0 0.0
    %191 = vmatpush.msra.mxu0 0.0
    %192 = vmatpush.msra.mxu0 0.0
    %193 = vmatpush.msra.mxu0 0.0
    %194 = vmatpush.msra.mxu0 0.0
    %195 = vmatpush.msra.mxu0 0.0
    %196 = vmatpush.msra.mxu0 %v146
    %197 = vmatpush.msra.mxu0 %v145
    %198 = vmatpush.msra.mxu0 %v144
    %199 = vmatpush.msra.mxu0 %v143
    %200 = vmatpush.msra.mxu0 %v142
    %201 = vmatpush.msra.mxu0 %v141
    %202 = vmatpush.msra.mxu0 %v140
    %203 = vmatpush.msra.mxu0 %v139
    %204 = vmatmul.f32.gmra.mxu0 %v151
    %v205 = vpop.f32.mrf.mxu0
    %v206 = vadd.f32 %v177, %v205
    %207 = vmatmul.f32.gmra.mxu0 %v153
    %v208 = vpop.f32.mrf.mxu0
    %v209 = vadd.f32 %v180, %v208
    %210 = vmatmul.f32.gmra.mxu0 %v155
    %v211 = vpop.f32.mrf.mxu0
    %v212 = vadd.f32 %v183, %v211
    %213 = vmatmul.f32.gmra.mxu0 %v157
    %v214 = vpop.f32.mrf.mxu0
    %v215 = vadd.f32 %v186, %v214
    %216 = vdwg.mxu0
    %v217 = vmax.f32 %v206, 0.0
    %v218 = vmax.f32 %v209, 0.0
    %v219 = vmax.f32 %v212, 0.0
    %v220 = vmax.f32 %v215, 0.0
    %221 = vst [vmem:[#allocation7] sm:$0xff] %v217
    %222 = vst [vmem:[#allocation7 + $0x8] sm:$0xff] %v218
    %223 = vst [vmem:[#allocation7 + $0x10] sm:$0xff] %v219
    %224 = vst [vmem:[#allocation7 + $0x18] sm:$0xff] %v220
    // Predicated region
    $region22: #{tpu_custom_call.1} parent=1 // pred_check
      _
    $region23: #{tpu_custom_call.1} parent=1 // pred_check_branch
      %226 = sbr.rel (0) target = $region25
    $region24: #{tpu_custom_call.1} parent=1 // pred_region
      %228 = vsyncadd [#allocation4], 0
      %s229 = sshll.u32 [#allocation7], 4
      %s230 = int_to_ptr.vmem [resolvable:$true] %s229
      %s231 = sshll.u32 %s3, 4
      %s232 = int_to_ptr.hbm [resolvable:$true] %s231
      %237 = dma.vmem_to_hbm [thread:$0]  %s230, 512, %s232, [#allocation4], 128, 128, 8
    $region25: #{tpu_custom_call.1} parent=1 // pred_fallthru
      _
    // Predicated region
    $region26: #{tpu_custom_call.1} parent=1 // pred_check
      _
    $region27: #{tpu_custom_call.1} parent=1 // pred_check_branch
      %239 = sbr.rel (0) target = $region29
    $region28: #{tpu_custom_call.1} parent=1 // pred_region
      %241 = dma.done [#allocation4], 512
    $region29: #{tpu_custom_call.1} parent=1 // pred_fallthru
      _
    %242 = vsyncpa [#allocation3], 1
    %243 = vsyncpa [#allocation6], 1
    %244 = vsyncpa [#allocation4], 1

</llo_original>
